<compile_context>
chip_gen: v7x
topology: tpu7x:2x2x1
jax: 0.10.0
libtpu: 0.0.40
codegen_flags: <defaults>
</compile_context>

<pallas_src>
import functools
import math

import jax
import jax.numpy as jnp
from jax.experimental import pallas as pl
from jax.experimental.pallas import tpu as pltpu

_LANES = 128


def _finish(xf, ms, w_ref, o_ref, eps, in_dtype):
    normed = xf * jax.lax.rsqrt(ms + eps)             # rsqrt on the EUP
    if in_dtype != jnp.float32:
        # Match PyTorch `.type_as(x)` rounding before the fp32-weight scale.
        # Guarded so f32 inputs pay no pack/unpack (v5e VPU has no bf16 ALU).
        normed = normed.astype(in_dtype).astype(jnp.float32)
    out = normed * w_ref[...].astype(jnp.float32)     # output * self.weight
    o_ref[...] = out.astype(o_ref.dtype)


def _rmsnorm_kernel(x_ref, w_ref, o_ref, *, eps):
    # Generic path: x_ref (tm, dim), w_ref (1, dim), o_ref (tm, dim).
    x = x_ref[...]
    xf = x.astype(jnp.float32)                              # x.float()
    ms = jnp.mean(xf * xf, axis=-1, keepdims=True)          # pow(2).mean(-1)
    _finish(xf, ms, w_ref, o_ref, eps, x.dtype)


def _rmsnorm_packed_kernel(x_ref, w_ref, o_ref, *, eps, dim):
    # Lane-packed path for dim < 128 with 128 % dim == 0.
    # x_ref/o_ref: (tm, 128); each row holds 128//dim original rows
    # ("segments") of length dim, contiguous in lanes (row-major reshape).
    # w_ref: (1, 128) = weight tiled 128//dim times (lane l -> weight[l % dim]).
    x = x_ref[...]
    xf = x.astype(jnp.float32)
    sq = xf * xf
    # Segmented all-reduce within each dim-lane segment via a butterfly of
    # lane rotations: after log2(dim) steps every lane holds its segment's
    # exact f32 sum (identical bits across the segment).  Rolls run on the
    # XLU, selects/adds on the VPU, so it co-issues under the HBM DMA.
    lane_id = jax.lax.broadcasted_iota(jnp.int32, (1, _LANES), 1)
    seg_sum = sq
    s = 1
    while s < dim:
        from_lo = pltpu.roll(seg_sum, shift=s, axis=1)           # value of lane p-s
        from_hi = pltpu.roll(seg_sum, shift=_LANES - s, axis=1)  # value of lane p+s
        take_lo = (lane_id & s) != 0     # bit s set -> butterfly partner is p-s
        seg_sum = seg_sum + jnp.where(take_lo, from_lo, from_hi)
        s *= 2
    ms = seg_sum * (1.0 / dim)           # dim is a power of two -> exact scale
    _finish(xf, ms, w_ref, o_ref, eps, x.dtype)


def _tpu_memory_profile():
    """Returns (physical VMEM bytes, dual_core?).

    The 64 MiB-VMEM generation (v7x) has 2 TensorCores/chip; the 128 MiB
    generations (v5e/v6e) have 1, so VMEM capacity doubles as a core-count
    proxy.  Falls back to the conservative (64 MiB, dual-core) profile.
    """
    vmem = 64 << 20
    try:
        info = pltpu.get_tpu_info()
        cap = int(getattr(info, "vmem_capacity_bytes", 0))
        if cap > 0:
            vmem = cap
    except Exception:
        pass
    return vmem, vmem < (100 << 20)


def _choose_block_rows(rows, width, in_itemsize, out_itemsize, *,
                       target_tile_bytes, dual_core):
    """Row-tile size for the grid.

    - sized so (input tile + output tile) ~= target_tile_bytes (mem-bound:
      large tiles amortize the ~0.35us per-grid-step overhead),
    - a multiple of 8 (sublanes) unless it covers all rows,
    - on dual-TensorCore chips only, biased to an even number of balanced
      grid steps so both cores get work; single-TC chips keep one big tile.
    """
    if rows <= 8:
        return rows
    bytes_per_row = max(1, width * (in_itemsize + out_itemsize))
    budget_rows = max(8, ((target_tile_bytes // bytes_per_row) // 8) * 8)
    min_steps = 2 if (dual_core and rows >= 16) else 1
    n_steps = max(min_steps, pl.cdiv(rows, budget_rows))
    if dual_core and n_steps > 1 and n_steps % 2:
        n_steps += 1
    tm = ((pl.cdiv(rows, n_steps) + 7) // 8) * 8
    return max(8, min(tm, budget_rows, rows))


def rmsnorm(x, weight, eps=1e-6, *, block_rows=None, out_dtype=None):
    """RMSNorm over the last axis of x, scaled by weight (shape (dim,))."""
    orig_shape = x.shape
    dim = orig_shape[-1]
    assert weight.shape == (dim,), (weight.shape, dim)

    rows = math.prod(orig_shape[:-1])

    # PyTorch promotion: normed (x.dtype) * fp32 weight -> f32 output for bf16
    # activations (the module's weight is an fp32 Parameter; a bf16 weight
    # would change rounding vs. the reference).  Pass out_dtype=x.dtype (with
    # model-owner sign-off) to store bf16 and cut store-side HBM bytes ~2x.
    if out_dtype is None:
        out_dtype = jnp.promote_types(x.dtype, weight.dtype)

    if rows == 0:
        return jnp.zeros(orig_shape, out_dtype)

    # Lane-dense packing for small feature dims: (rows, dim) -> (rows*dim/128,
    # 128) is a free, contiguous reshape; segments stay row-aligned so garbage
    # tail segments of a partial last block remain confined to masked rows.
    pack = _LANES // dim if (dim < _LANES and _LANES % dim == 0) else 0
    use_packed = pack > 1 and (rows % pack == 0)

    if use_packed:
        width = _LANES
        rows2d = (rows * dim) // _LANES
        x2d = x.reshape(rows2d, width)
        w2d = jnp.tile(weight, pack).reshape(1, width)
        kernel = functools.partial(_rmsnorm_packed_kernel, eps=eps, dim=dim)
    else:
        width = dim
        rows2d = rows
        x2d = x.reshape(rows2d, width)
        w2d = weight.reshape(1, width)
        kernel = functools.partial(_rmsnorm_kernel, eps=eps)

    in_itemsize = jnp.dtype(x.dtype).itemsize
    out_itemsize = jnp.dtype(out_dtype).itemsize

    vmem_cap, dual_core = _tpu_memory_profile()
    # Bigger tiles on 128 MiB-VMEM chips (v5e/v6e); ~10 MiB on v7x where the
    # faster HBM makes the fixed per-step overhead proportionally larger but
    # VMEM is only 64 MiB.
    target_tile_bytes = (16 << 20) if vmem_cap >= (100 << 20) else (10 << 20)

    tm = block_rows if block_rows is not None else _choose_block_rows(
        rows2d, width, in_itemsize, out_itemsize,
        target_tile_bytes=target_tile_bytes, dual_core=dual_core)
    tm = min(tm, rows2d)

    grid = (pl.cdiv(rows2d, tm),)  # no padding: OOB tail writes are masked

    # Explicit VMEM budget: double-buffered in/out tiles + f32 intermediates
    # + weight, clamped to [32 MiB, 3/4 of physical VMEM] so it never drops
    # below any generation's default scoped limit.
    tile_bytes = tm * width * (in_itemsize + out_itemsize)
    vmem_limit = 2 * tile_bytes                      # 2-deep pipelined in+out
    vmem_limit += 4 * tm * width * 4                 # f32 intermediates headroom
    vmem_limit += 2 * width * 4                      # weight row
    vmem_limit += 2 << 20
    vmem_limit = int(min(max(vmem_limit, 32 << 20), (vmem_cap * 3) // 4))

    out = pl.pallas_call(
        kernel,
        out_shape=jax.ShapeDtypeStruct((rows2d, width), out_dtype),
        grid_spec=pltpu.PrefetchScalarGridSpec(
            num_scalar_prefetch=0,
            grid=grid,
            in_specs=[
                # TODO(synk): if a profile ever shows exposed DMA at step
                # boundaries for tiny problems, sweep pipeline_mode=
                # pl.Buffered(3) on this spec before committing.
                pl.BlockSpec((tm, width), lambda i: (i, 0)),
                pl.BlockSpec((1, width), lambda i: (0, 0)),
            ],
            out_specs=pl.BlockSpec((tm, width), lambda i: (i, 0)),
        ),
        compiler_params=pltpu.CompilerParams(
            dimension_semantics=("parallel",),
            vmem_limit_bytes=vmem_limit,
        ),
    )(x2d, w2d)

    return out.reshape(orig_shape)


def rmsnorm_ref(x, weight, eps=1e-6):
    xf = x.astype(jnp.float32)
    normed = xf * jax.lax.rsqrt(jnp.mean(xf * xf, axis=-1, keepdims=True) + eps)
    normed = normed.astype(x.dtype)
    return normed * weight


if __name__ == "__main__":
    key = jax.random.PRNGKey(0)

    # Primary check (module-implied shapes): batch=2, seq=8, hidden=32.
    # rows=16 is a multiple of 128/32=4, so this exercises the lane-packed path.
    batch, seq, hidden = 2, 8, 32
    x = jax.random.normal(key, (batch, seq, hidden), dtype=jnp.float32)
    weight = jnp.ones((hidden,), dtype=jnp.float32)  # module init: torch.ones(dim)

    y = jax.block_until_ready(rmsnorm(x, weight, eps=1e-6))
    y_ref = rmsnorm_ref(x, weight, eps=1e-6)
    assert y.shape == x.shape, (y.shape, x.shape)
    assert y.dtype == y_ref.dtype, (y.dtype, y_ref.dtype)
    assert jnp.allclose(y, y_ref, atol=1e-5, rtol=1e-5), "packed-path mismatch"

    # Packed path with a non-trivial weight (validates the lane tiling of w).
    kx, kw = jax.random.split(jax.random.PRNGKey(1))
    x1 = jax.random.normal(kx, (4, 8, hidden), dtype=jnp.float32) * 0.5 + 1.0
    w1 = jax.random.normal(kw, (hidden,), dtype=jnp.float32)
    y1 = jax.block_until_ready(rmsnorm(x1, w1, eps=1e-6))
    assert jnp.allclose(y1, rmsnorm_ref(x1, w1, eps=1e-6), atol=1e-5, rtol=1e-5), \
        "packed-path weighted mismatch"

    # Ragged row count (rows=18 not a multiple of 128/dim=4): falls back to the
    # generic path and exercises the un-padded partial last block / masked
    # tail stores.
    x2 = jax.random.normal(jax.random.PRNGKey(2), (2, 9, hidden), dtype=jnp.float32)
    w2 = jax.random.normal(jax.random.PRNGKey(3), (hidden,), dtype=jnp.float32)
    y2 = jax.block_until_ready(rmsnorm(x2, w2, eps=1e-6))
    assert jnp.allclose(y2, rmsnorm_ref(x2, w2, eps=1e-6), atol=1e-5, rtol=1e-5), \
        "ragged-tail mismatch"

    print("KERNEL_OK")
</pallas_src>

<mosaic_0001>
module attributes {stable_mosaic.version = 11 : i64} {
  func.func @_rmsnorm_packed_kernel(%arg0: i32, %arg1: memref<4x128xf32, #tpu.memory_space<vmem>>, %arg2: memref<1x128xf32, #tpu.memory_space<vmem>>, %arg3: memref<4x128xf32, #tpu.memory_space<vmem>>) attributes {dimension_semantics = [#tpu.dimension_semantics<parallel>], iteration_bounds = array<i64: 1>, scalar_prefetch = 0 : i64, scratch_operands = 0 : i64, tpu.core_type = #tpu.core_type<tc>, window_params = [{transform_indices = @transform_0, window_bounds = array<i64: 4, 128>}, {pipeline_mode = #tpu.pipeline_mode<synchronous>, transform_indices = @transform_1, window_bounds = array<i64: 1, 128>}, {transform_indices = @transform_2, window_bounds = array<i64: 4, 128>}]} {
    %c0 = arith.constant 0 : index
    %c0_0 = arith.constant 0 : index
    %0 = vector.load %arg1[%c0, %c0_0] : memref<4x128xf32, #tpu.memory_space<vmem>>, vector<4x128xf32>
    %1 = arith.mulf %0, %0 : vector<4x128xf32>
    %2 = tpu.iota {dimensions = array<i32: 1>} : vector<1x128xi32>
    %c1_i32 = arith.constant 1 : i32
    %3 = tpu.dynamic_rotate %1 by %c1_i32 dim 1 : vector<4x128xf32>, i32 -> vector<4x128xf32>
    %c127_i32 = arith.constant 127 : i32
    %4 = tpu.dynamic_rotate %1 by %c127_i32 dim 1 : vector<4x128xf32>, i32 -> vector<4x128xf32>
    %c1_i32_1 = arith.constant 1 : i32
    %5 = vector.broadcast %c1_i32_1 : i32 to vector<1x128xi32>
    %6 = arith.andi %2, %5 : vector<1x128xi32>
    %c0_i32 = arith.constant 0 : i32
    %7 = vector.broadcast %c0_i32 : i32 to vector<1x128xi32>
    %8 = arith.cmpi ne, %6, %7 : vector<1x128xi32>
    %9 = vector.shape_cast %8 : vector<1x128xi1> to vector<1x128xi1>
    %10 = vector.broadcast %9 : vector<1x128xi1> to vector<4x128xi1>
    %11 = arith.select %10, %3, %4 : vector<4x128xi1>, vector<4x128xf32>
    %12 = arith.addf %1, %11 : vector<4x128xf32>
    %c2_i32 = arith.constant 2 : i32
    %13 = tpu.dynamic_rotate %12 by %c2_i32 dim 1 : vector<4x128xf32>, i32 -> vector<4x128xf32>
    %c126_i32 = arith.constant 126 : i32
    %14 = tpu.dynamic_rotate %12 by %c126_i32 dim 1 : vector<4x128xf32>, i32 -> vector<4x128xf32>
    %c2_i32_2 = arith.constant 2 : i32
    %15 = vector.broadcast %c2_i32_2 : i32 to vector<1x128xi32>
    %16 = arith.andi %2, %15 : vector<1x128xi32>
    %c0_i32_3 = arith.constant 0 : i32
    %17 = vector.broadcast %c0_i32_3 : i32 to vector<1x128xi32>
    %18 = arith.cmpi ne, %16, %17 : vector<1x128xi32>
    %19 = vector.shape_cast %18 : vector<1x128xi1> to vector<1x128xi1>
    %20 = vector.broadcast %19 : vector<1x128xi1> to vector<4x128xi1>
    %21 = arith.select %20, %13, %14 : vector<4x128xi1>, vector<4x128xf32>
    %22 = arith.addf %12, %21 : vector<4x128xf32>
    %c4_i32 = arith.constant 4 : i32
    %23 = tpu.dynamic_rotate %22 by %c4_i32 dim 1 : vector<4x128xf32>, i32 -> vector<4x128xf32>
    %c124_i32 = arith.constant 124 : i32
    %24 = tpu.dynamic_rotate %22 by %c124_i32 dim 1 : vector<4x128xf32>, i32 -> vector<4x128xf32>
    %c4_i32_4 = arith.constant 4 : i32
    %25 = vector.broadcast %c4_i32_4 : i32 to vector<1x128xi32>
    %26 = arith.andi %2, %25 : vector<1x128xi32>
    %c0_i32_5 = arith.constant 0 : i32
    %27 = vector.broadcast %c0_i32_5 : i32 to vector<1x128xi32>
    %28 = arith.cmpi ne, %26, %27 : vector<1x128xi32>
    %29 = vector.shape_cast %28 : vector<1x128xi1> to vector<1x128xi1>
    %30 = vector.broadcast %29 : vector<1x128xi1> to vector<4x128xi1>
    %31 = arith.select %30, %23, %24 : vector<4x128xi1>, vector<4x128xf32>
    %32 = arith.addf %22, %31 : vector<4x128xf32>
    %c8_i32 = arith.constant 8 : i32
    %33 = tpu.dynamic_rotate %32 by %c8_i32 dim 1 : vector<4x128xf32>, i32 -> vector<4x128xf32>
    %c120_i32 = arith.constant 120 : i32
    %34 = tpu.dynamic_rotate %32 by %c120_i32 dim 1 : vector<4x128xf32>, i32 -> vector<4x128xf32>
    %c8_i32_6 = arith.constant 8 : i32
    %35 = vector.broadcast %c8_i32_6 : i32 to vector<1x128xi32>
    %36 = arith.andi %2, %35 : vector<1x128xi32>
    %c0_i32_7 = arith.constant 0 : i32
    %37 = vector.broadcast %c0_i32_7 : i32 to vector<1x128xi32>
    %38 = arith.cmpi ne, %36, %37 : vector<1x128xi32>
    %39 = vector.shape_cast %38 : vector<1x128xi1> to vector<1x128xi1>
    %40 = vector.broadcast %39 : vector<1x128xi1> to vector<4x128xi1>
    %41 = arith.select %40, %33, %34 : vector<4x128xi1>, vector<4x128xf32>
    %42 = arith.addf %32, %41 : vector<4x128xf32>
    %c16_i32 = arith.constant 16 : i32
    %43 = tpu.dynamic_rotate %42 by %c16_i32 dim 1 : vector<4x128xf32>, i32 -> vector<4x128xf32>
    %c112_i32 = arith.constant 112 : i32
    %44 = tpu.dynamic_rotate %42 by %c112_i32 dim 1 : vector<4x128xf32>, i32 -> vector<4x128xf32>
    %c16_i32_8 = arith.constant 16 : i32
    %45 = vector.broadcast %c16_i32_8 : i32 to vector<1x128xi32>
    %46 = arith.andi %2, %45 : vector<1x128xi32>
    %c0_i32_9 = arith.constant 0 : i32
    %47 = vector.broadcast %c0_i32_9 : i32 to vector<1x128xi32>
    %48 = arith.cmpi ne, %46, %47 : vector<1x128xi32>
    %49 = vector.shape_cast %48 : vector<1x128xi1> to vector<1x128xi1>
    %50 = vector.broadcast %49 : vector<1x128xi1> to vector<4x128xi1>
    %51 = arith.select %50, %43, %44 : vector<4x128xi1>, vector<4x128xf32>
    %52 = arith.addf %42, %51 : vector<4x128xf32>
    %cst = arith.constant 3.125000e-02 : f32
    %53 = vector.broadcast %cst : f32 to vector<4x128xf32>
    %54 = arith.mulf %52, %53 : vector<4x128xf32>
    %cst_10 = arith.constant 9.99999997E-7 : f32
    %55 = vector.broadcast %cst_10 : f32 to vector<4x128xf32>
    %56 = arith.addf %54, %55 : vector<4x128xf32>
    %57 = math.rsqrt %56 : vector<4x128xf32>
    %58 = arith.mulf %0, %57 : vector<4x128xf32>
    %c0_11 = arith.constant 0 : index
    %c0_12 = arith.constant 0 : index
    %59 = vector.load %arg2[%c0_11, %c0_12] : memref<1x128xf32, #tpu.memory_space<vmem>>, vector<1x128xf32>
    %60 = vector.broadcast %59 : vector<1x128xf32> to vector<4x128xf32>
    %61 = arith.mulf %58, %60 : vector<4x128xf32>
    %c0_13 = arith.constant 0 : index
    %c0_14 = arith.constant 0 : index
    %62 = vector.load %arg3[%c0_13, %c0_14] : memref<4x128xf32, #tpu.memory_space<vmem>>, vector<4x128xf32>
    tpu.vector_store %arg3[%c0_13, %c0_14], %61 {strides = array<i32>} : memref<4x128xf32, #tpu.memory_space<vmem>>, vector<4x128xf32>,
    return
  }
  func.func @transform_0(%arg0: i32) -> (i32, i32) {
    %c0_i32 = arith.constant 0 : i32
    %c0_i32_0 = arith.constant 0 : i32
    return %arg0, %c0_i32 : i32, i32
  }
  func.func @transform_1(%arg0: i32) -> (i32, i32) {
    %c0_i32 = arith.constant 0 : i32
    %c0_i32_0 = arith.constant 0 : i32
    %c0_i32_1 = arith.constant 0 : i32
    return %c0_i32, %c0_i32_0 : i32, i32
  }
  func.func @transform_2(%arg0: i32) -> (i32, i32) {
    %c0_i32 = arith.constant 0 : i32
    %c0_i32_0 = arith.constant 0 : i32
    return %arg0, %c0_i32 : i32, i32
  }
}

</mosaic_0001>

<llo_original>
// kernel: tpu_custom_call.1
$region0: #{tpu_custom_call.1}
  #allocation0 [shape = 'u32[]', space=smem, size = 0x4, offset = 0x4, fixed_abs, tag = 'smem constant byte address 0x4 - core index']
  #allocation1 [shape = 'u32[144,128]{1,0:T(1,128)}', space=vmem, size = 0x12000, scoped, tag = 'internal scratch']
  %s0 = inlined_call_operand.hbm [shape: f32[4,128], index: 0, kind: input, shape index: {}]
  %s1 = inlined_call_operand.vmem [shape: f32[1,128], index: 1, kind: input, shape index: {}]
  %s2 = inlined_call_operand.hbm [shape: f32[4,128], index: 2, kind: output, shape index: {}]
  %s3 = sld [smem:[#allocation0]]
  $region22: #{tpu_custom_call.1} parent=0
    _
  %s5 = ssub.s32 1, %s3
  %s6 = scalar_select 0, %s5, %s3
  $region1: #{tpu_custom_call.1} parent=0
    #allocation2 [shape = 'u8[2048]{0}', space=vmem, size = 0x800, scoped, tag = 'input window, operand 0, single buffered']
    #allocation3 [shape = 's32[1]{0}', space=sflag, size = 0x4, scoped, tag = 'scoped memory for tpu_custom_call.1']
    #allocation4 [shape = 's32[1]{0}', space=sflag, size = 0x4, scoped, tag = 'scoped memory for tpu_custom_call.1']
    #allocation5 [shape = 'u8[2048]{0}', space=vmem, size = 0x800, scoped, tag = 'output window, operand 0, single buffered']
    %7 = vsyncpa [#allocation3], 0
    %8 = vsyncpa [#allocation4], 0
    // Predicated region
    $region2: #{tpu_custom_call.1} parent=1 // pred_check
      _
    $region3: #{tpu_custom_call.1} parent=1 // pred_check_branch
      %10 = sbr.rel (0) target = $region5
    $region4: #{tpu_custom_call.1} parent=1 // pred_region
      %s12 = ssub.s32 64, 64
      %13 = vsyncadd [#allocation3], %s12
      %s15 = sshll.u32 [#allocation2], 4
      %s16 = int_to_ptr.vmem [resolvable:$true] %s15
      %18 = dma.hbm_to_vmem [thread:$0]  %s0, 64, %s16, [#allocation3]
    $region5: #{tpu_custom_call.1} parent=1 // pred_fallthru
      _
    // Predicated region
    $region6: #{tpu_custom_call.1} parent=1 // pred_check
      _
    $region7: #{tpu_custom_call.1} parent=1 // pred_check_branch
      %20 = sbr.rel (0) target = $region9
    $region8: #{tpu_custom_call.1} parent=1 // pred_region
      _
    $region9: #{tpu_custom_call.1} parent=1 // pred_fallthru
      _
    // Predicated region
    $region10: #{tpu_custom_call.1} parent=1 // pred_check
      _
    $region11: #{tpu_custom_call.1} parent=1 // pred_check_branch
      %22 = sbr.rel (0) target = $region13
    $region12: #{tpu_custom_call.1} parent=1 // pred_region
      %23 = dma.done [#allocation3], 64
    $region13: #{tpu_custom_call.1} parent=1 // pred_fallthru
      _
    %v24 = vld [vmem:[#allocation2] sm:$0xf]
    %v25 = vmul.f32 %v24, %v24
    %v26 = vlaneseq
    %v27 = vand.u32 %v26, 127
    %28 = vrot.lane.b32.xlu0 %v25, 1
    %v29 = vpop.permute.xlu0 %28
    %30 = vrot.lane.b32.xlu0 %v25, 127
    %v31 = vpop.permute.xlu0 %30
    %v32 = vand.u32 %v27, 1
    %vm33 = vcmp.ne.s32.totalorder %v32, 0
    %v34 = vsel %vm33, 1, 0
    %vm35 = vcmp.eq.s32.totalorder %v34, 1
    %v36 = vsel %vm35, %v29, %v31
    %v37 = vadd.f32 %v25, %v36
    %38 = vrot.lane.b32.xlu0 %v37, 2
    %v39 = vpop.permute.xlu0 %38
    %40 = vrot.lane.b32.xlu0 %v37, 126
    %v41 = vpop.permute.xlu0 %40
    %v42 = vand.u32 %v27, 2
    %vm43 = vcmp.ne.s32.totalorder %v42, 0
    %v44 = vsel %vm43, 1, 0
    %vm45 = vcmp.eq.s32.totalorder %v44, 1
    %v46 = vsel %vm45, %v39, %v41
    %v47 = vadd.f32 %v37, %v46
    %48 = vrot.lane.b32.xlu0 %v47, 4
    %v49 = vpop.permute.xlu0 %48
    %50 = vrot.lane.b32.xlu0 %v47, 124
    %v51 = vpop.permute.xlu0 %50
    %v52 = vand.u32 %v27, 4
    %vm53 = vcmp.ne.s32.totalorder %v52, 0
    %v54 = vsel %vm53, 1, 0
    %vm55 = vcmp.eq.s32.totalorder %v54, 1
    %v56 = vsel %vm55, %v49, %v51
    %v57 = vadd.f32 %v47, %v56
    %58 = vrot.lane.b32.xlu0 %v57, 8
    %v59 = vpop.permute.xlu0 %58
    %60 = vrot.lane.b32.xlu0 %v57, 120
    %v61 = vpop.permute.xlu0 %60
    %v62 = vand.u32 %v27, 8
    %vm63 = vcmp.ne.s32.totalorder %v62, 0
    %v64 = vsel %vm63, 1, 0
    %vm65 = vcmp.eq.s32.totalorder %v64, 1
    %v66 = vsel %vm65, %v59, %v61
    %v67 = vadd.f32 %v57, %v66
    %68 = vrot.lane.b32.xlu0 %v67, 16
    %v69 = vpop.permute.xlu0 %68
    %70 = vrot.lane.b32.xlu0 %v67, 112
    %v71 = vpop.permute.xlu0 %70
    %v72 = vand.u32 %v27, 16
    %vm73 = vcmp.ne.s32.totalorder %v72, 0
    %v74 = vsel %vm73, 1, 0
    %vm75 = vcmp.eq.s32.totalorder %v74, 1
    %v76 = vsel %vm75, %v69, %v71
    %v77 = vadd.f32 %v67, %v76
    %v78 = vmul.f32 %v77, 0.03125
    %v79 = vadd.f32 %v78, 1e-06
    %v80 = vrsqrt.pop %v79
    %v81 = vmul.f32 %v24, %v80
    %v82 = vld [vmem:[%s1] sm:$0x1]
    %v84 = vlaneseq
    %v85 = vshrl.u32 %v84, 7
    %v86 = vsub.s32 0, %v85
    %v87 = vrot.slane %v82, %v86
    %v89 = vmul.f32 %v81, %v87
    %90 = vst [vmem:[#allocation5] sm:$0xf] %v89
    // Predicated region
    $region14: #{tpu_custom_call.1} parent=1 // pred_check
      _
    $region15: #{tpu_custom_call.1} parent=1 // pred_check_branch
      %92 = sbr.rel (0) target = $region17
    $region16: #{tpu_custom_call.1} parent=1 // pred_region
      %s94 = ssub.s32 64, 64
      %95 = vsyncadd [#allocation4], %s94
      %s97 = sshll.u32 [#allocation5], 4
      %s98 = int_to_ptr.vmem [resolvable:$true] %s97
      %100 = dma.vmem_to_hbm [thread:$0]  %s98, 64, %s2, [#allocation4]
    $region17: #{tpu_custom_call.1} parent=1 // pred_fallthru
      _
    // Predicated region
    $region18: #{tpu_custom_call.1} parent=1 // pred_check
      _
    $region19: #{tpu_custom_call.1} parent=1 // pred_check_branch
      %102 = sbr.rel (0) target = $region21
    $region20: #{tpu_custom_call.1} parent=1 // pred_region
      %103 = dma.done [#allocation4], 64
    $region21: #{tpu_custom_call.1} parent=1 // pred_fallthru
      _
    %104 = vsyncpa [#allocation3], 1
    %105 = vsyncpa [#allocation4], 1

</llo_original>
